<compile_context>
chip_gen: v5e
topology: v5e:2x2
jax: 0.10.0
libtpu: 0.0.40
codegen_flags: <defaults>
</compile_context>

<pallas_src>
import functools

import jax
import jax.numpy as jnp
from jax.experimental import pallas as pl
from jax.experimental.pallas import tpu as pltpu

LANE = 128
_MIN_SPLIT_ROWS = 1024  # don't split tiny batches across two grid steps


def _round_up(n, m):
    return ((n + m - 1) // m) * m


def _cdiv(a, b):
    return -(-a // b)


def _pad2d(a, rows, cols):
    r, c = a.shape
    return jnp.pad(a, ((0, rows - r), (0, cols - c)))


def mlp_kernel(x_ref,
               w1_ref, b1_ref,
               w2_ref, b2_ref,
               w3_ref, b3_ref,
               w4_ref, b4_ref,
               w5_ref, b5_ref,
               o_ref):
    """Fused 5-layer MLP on one (TB, in) batch tile. Weights resident in VMEM."""
    # In-kernel f32 -> bf16 downcast (VPU slot; avoids a separate wrapper pass).
    h = x_ref[...].astype(jnp.bfloat16)

    def dense_relu(h, w_ref, b_ref):
        # bf16 x bf16 -> f32 accumulation on the MXU; bias + ReLU in f32 (VPU),
        # downcast to bf16 only as the next matmul operand.
        z = jnp.dot(h, w_ref[...], preferred_element_type=jnp.float32) + b_ref[...]
        return jnp.maximum(z, 0.0).astype(jnp.bfloat16)

    h = dense_relu(h, w1_ref, b1_ref)   # (TB, 256)
    h = dense_relu(h, w2_ref, b2_ref)   # (TB, 128)
    h = dense_relu(h, w3_ref, b3_ref)   # (TB, 128)  (64 zero-padded to 128)
    h = dense_relu(h, w4_ref, b4_ref)   # (TB, 128)  (32 zero-padded to 128)
    # Final linear: no activation; lane-dense (TB, 128) bf16 store.
    out = jnp.dot(h, w5_ref[...], preferred_element_type=jnp.float32) + b5_ref[...]
    o_ref[...] = out.astype(o_ref.dtype)


def prepare_params(params, in_size):
    """Zero-pad narrow dims to 128 lanes; weights -> bf16, biases -> f32.

    Call ONCE per set of weights (outside the jitted per-call path) and reuse
    the returned flat tuple across forward calls.

    Input `params`: list of (W, b) with W (fan_in, fan_out) and b (1, fan_out)
    f32 (PyTorch layer shapes, weights stored transposed). Zero padding on both
    the extra rows and columns keeps the sliced real outputs exact
    (padded bias = 0 -> ReLU(0) = 0 -> padded activation columns contribute 0).
    """
    flat = []
    in_dim = in_size
    for (w, b) in params:
        fan_in, fan_out = w.shape
        assert fan_in <= in_dim
        out_dim = _round_up(fan_out, LANE)
        flat.append(_pad2d(w, in_dim, out_dim).astype(jnp.bfloat16))
        flat.append(_pad2d(b.reshape(1, -1), 1, out_dim).astype(jnp.float32))
        in_dim = out_dim
    return tuple(flat)


def _choose_tiling(batch, tile_b):
    """Pick (n_tiles, tb): balanced tiles, small ragged waste, even grid on v7x."""
    n = max(1, _cdiv(batch, tile_b))
    # v7x has 2 TensorCores; keep the "parallel" grid even when there is
    # enough work to split. Neutral on single-TC v5e/v6e.
    if batch >= 2 * _MIN_SPLIT_ROWS and n % 2 == 1:
        n = 2 if n == 1 else n + 1
    tb = _round_up(_cdiv(batch, n), 8)
    return n, tb


@functools.partial(jax.jit, static_argnames=("out_size", "tile_b"))
def neural_net_forward(x, flat_params, *, out_size, tile_b=1024):
    """x: (B, in_size) f32. flat_params: output of prepare_params (reused)."""
    B, in_size = x.shape
    flat = tuple(flat_params)
    out_pad = flat[-2].shape[1]                 # final padded output width (>=128)

    n_tiles, tb = _choose_tiling(B, tile_b)
    b_pad = n_tiles * tb

    # Only the ragged tail rows are padded (no wrapper-side dtype cast pass).
    x_p = jnp.pad(x, ((0, b_pad - B), (0, 0))) if b_pad != B else x

    in_specs = [pl.BlockSpec((tb, in_size), lambda i: (i, 0))]
    # Weights/biases: full-extent blocks with constant block index => fetched
    # once and resident in VMEM across all batch tiles.
    for a in flat:
        in_specs.append(pl.BlockSpec(a.shape, lambda i: (0, 0)))

    # VMEM budget: double-buffered x (f32) / out (bf16) tiles + resident params
    # + headroom for intermediate activations. Keeps full double-buffering on
    # v5e (16 MiB default scoped limit) and under v7x's 64 MiB physical VMEM.
    in_pad = _round_up(in_size, LANE)
    param_bytes = sum(int(a.size) * a.dtype.itemsize for a in flat)
    pipeline_bytes = 2 * tb * (in_pad * 4 + out_pad * 2)
    scratch_bytes = tb * 8 * 1024
    vmem_limit = min(max(pipeline_bytes + 2 * param_bytes + scratch_bytes,
                         16 << 20), 64 << 20)

    out = pl.pallas_call(
        mlp_kernel,
        out_shape=jax.ShapeDtypeStruct((b_pad, out_pad), jnp.bfloat16),
        grid_spec=pltpu.PrefetchScalarGridSpec(
            num_scalar_prefetch=0,
            grid=(n_tiles,),
            in_specs=in_specs,
            out_specs=pl.BlockSpec((tb, out_pad), lambda i: (i, 0)),
        ),
        compiler_params=pltpu.CompilerParams(
            dimension_semantics=("parallel",),
            vmem_limit_bytes=int(vmem_limit),
        ),
    )(x_p, *flat)

    # Lane-dense bf16 store in-kernel; slice real rows/cols and upcast here.
    return out[:B, :out_size].astype(jnp.float32)


def init_params(key, in_size, out_size):
    """Deterministic init matching the PyTorch layer shapes (stored transposed)."""
    dims = [in_size, 256, 128, 64, 32, out_size]
    params = []
    for i in range(len(dims) - 1):
        fan_in, fan_out = dims[i], dims[i + 1]
        key, kw, kb = jax.random.split(key, 3)
        bound = 1.0 / jnp.sqrt(fan_in)
        w = jax.random.uniform(kw, (fan_in, fan_out), jnp.float32, -bound, bound)
        b = jax.random.uniform(kb, (1, fan_out), jnp.float32, -bound, bound)
        params.append((w, b))
    return params


def reference_forward(x, params, compute_dtype=jnp.float32):
    """Pure-JAX reference; compute_dtype controls the matmul operand precision."""
    h = x
    for i, (w, b) in enumerate(params):
        h = jnp.dot(h.astype(compute_dtype), w.astype(compute_dtype),
                    preferred_element_type=jnp.float32) + b.astype(jnp.float32)
        if i < len(params) - 1:
            h = jnp.maximum(h, 0.0)
    return h


if __name__ == "__main__":
    in_size, out_size = 64, 10
    batch = 8

    key = jax.random.PRNGKey(0)
    key, kx = jax.random.split(key)
    x = jax.random.normal(kx, (batch, in_size), jnp.float32)
    params = init_params(key, in_size, out_size)

    # Pad/cast weights once; reuse across calls (hoisted out of the jit path).
    flat = prepare_params(params, in_size)

    out = neural_net_forward(x, flat, out_size=out_size)
    out = jax.block_until_ready(out)

    ref_bf16 = reference_forward(x, params, compute_dtype=jnp.bfloat16)
    ref_f32 = reference_forward(x, params, compute_dtype=jnp.float32)

    assert out.shape == (batch, out_size)
    # Check vs the same bf16-operand / f32-accumulate numerics (kernel adds one
    # extra bf16 rounding on the stored output => slightly relaxed tolerance).
    assert jnp.allclose(out, ref_bf16, atol=2e-2, rtol=2e-2), "mismatch vs bf16 reference"
    # Loose sanity check vs full-f32 math (bf16 operand rounding only).
    assert jnp.allclose(out, ref_f32, atol=1e-1, rtol=1e-1), "mismatch vs f32 reference"

    print("KERNEL_OK")
</pallas_src>

<mosaic_0001>
module attributes {stable_mosaic.version = 11 : i64} {
  func.func @mlp_kernel(%arg0: i32, %arg1: memref<8x64xf32, #tpu.memory_space<vmem>>, %arg2: memref<64x256xbf16, #tpu.memory_space<vmem>>, %arg3: memref<1x256xf32, #tpu.memory_space<vmem>>, %arg4: memref<256x128xbf16, #tpu.memory_space<vmem>>, %arg5: memref<1x128xf32, #tpu.memory_space<vmem>>, %arg6: memref<128x128xbf16, #tpu.memory_space<vmem>>, %arg7: memref<1x128xf32, #tpu.memory_space<vmem>>, %arg8: memref<128x128xbf16, #tpu.memory_space<vmem>>, %arg9: memref<1x128xf32, #tpu.memory_space<vmem>>, %arg10: memref<128x128xbf16, #tpu.memory_space<vmem>>, %arg11: memref<1x128xf32, #tpu.memory_space<vmem>>, %arg12: memref<8x128xbf16, #tpu.memory_space<vmem>>) attributes {dimension_semantics = [#tpu.dimension_semantics<parallel>], iteration_bounds = array<i64: 1>, scalar_prefetch = 0 : i64, scratch_operands = 0 : i64, tpu.core_type = #tpu.core_type<tc>, window_params = [{transform_indices = @transform_0, window_bounds = array<i64: 8, 64>}, {pipeline_mode = #tpu.pipeline_mode<synchronous>, transform_indices = @transform_1, window_bounds = array<i64: 64, 256>}, {pipeline_mode = #tpu.pipeline_mode<synchronous>, transform_indices = @transform_2, window_bounds = array<i64: 1, 256>}, {pipeline_mode = #tpu.pipeline_mode<synchronous>, transform_indices = @transform_3, window_bounds = array<i64: 256, 128>}, {pipeline_mode = #tpu.pipeline_mode<synchronous>, transform_indices = @transform_4, window_bounds = array<i64: 1, 128>}, {pipeline_mode = #tpu.pipeline_mode<synchronous>, transform_indices = @transform_5, window_bounds = array<i64: 128, 128>}, {pipeline_mode = #tpu.pipeline_mode<synchronous>, transform_indices = @transform_6, window_bounds = array<i64: 1, 128>}, {pipeline_mode = #tpu.pipeline_mode<synchronous>, transform_indices = @transform_7, window_bounds = array<i64: 128, 128>}, {pipeline_mode = #tpu.pipeline_mode<synchronous>, transform_indices = @transform_8, window_bounds = array<i64: 1, 128>}, {pipeline_mode = #tpu.pipeline_mode<synchronous>, transform_indices = @transform_9, window_bounds = array<i64: 128, 128>}, {pipeline_mode = #tpu.pipeline_mode<synchronous>, transform_indices = @transform_10, window_bounds = array<i64: 1, 128>}, {transform_indices = @transform_11, window_bounds = array<i64: 8, 128>}]} {
    %c0 = arith.constant 0 : index
    %c0_0 = arith.constant 0 : index
    %0 = vector.load %arg1[%c0, %c0_0] : memref<8x64xf32, #tpu.memory_space<vmem>>, vector<8x64xf32>
    %1 = arith.truncf %0 : vector<8x64xf32> to vector<8x64xbf16>
    %c0_1 = arith.constant 0 : index
    %c0_2 = arith.constant 0 : index
    %2 = vector.load %arg2[%c0_1, %c0_2] : memref<64x256xbf16, #tpu.memory_space<vmem>>, vector<64x256xbf16>
    %cst = arith.constant dense<0.000000e+00> : vector<8x256xf32>
    %3 = tpu.matmul %1, %2, %cst {dimension_numbers = #tpu.dot_dimension_numbers<[1], [0], [0], [1], [0, 0, 1, 1], [], []>} : vector<8x64xbf16>, vector<64x256xbf16>, vector<8x256xf32> -> vector<8x256xf32>
    %c0_3 = arith.constant 0 : index
    %c0_4 = arith.constant 0 : index
    %4 = vector.load %arg3[%c0_3, %c0_4] : memref<1x256xf32, #tpu.memory_space<vmem>>, vector<1x256xf32>
    %5 = vector.broadcast %4 : vector<1x256xf32> to vector<8x256xf32>
    %6 = arith.addf %3, %5 : vector<8x256xf32>
    %cst_5 = arith.constant 0.000000e+00 : f32
    %7 = vector.broadcast %cst_5 : f32 to vector<8x256xf32>
    %8 = arith.maximumf %6, %7 : vector<8x256xf32>
    %9 = arith.truncf %8 : vector<8x256xf32> to vector<8x256xbf16>
    %c0_6 = arith.constant 0 : index
    %c0_7 = arith.constant 0 : index
    %10 = vector.load %arg4[%c0_6, %c0_7] : memref<256x128xbf16, #tpu.memory_space<vmem>>, vector<256x128xbf16>
    %cst_8 = arith.constant dense<0.000000e+00> : vector<8x128xf32>
    %11 = tpu.matmul %9, %10, %cst_8 {dimension_numbers = #tpu.dot_dimension_numbers<[1], [0], [0], [1], [0, 0, 1, 1], [], []>} : vector<8x256xbf16>, vector<256x128xbf16>, vector<8x128xf32> -> vector<8x128xf32>
    %c0_9 = arith.constant 0 : index
    %c0_10 = arith.constant 0 : index
    %12 = vector.load %arg5[%c0_9, %c0_10] : memref<1x128xf32, #tpu.memory_space<vmem>>, vector<1x128xf32>
    %13 = vector.broadcast %12 : vector<1x128xf32> to vector<8x128xf32>
    %14 = arith.addf %11, %13 : vector<8x128xf32>
    %cst_11 = arith.constant 0.000000e+00 : f32
    %15 = vector.broadcast %cst_11 : f32 to vector<8x128xf32>
    %16 = arith.maximumf %14, %15 : vector<8x128xf32>
    %17 = arith.truncf %16 : vector<8x128xf32> to vector<8x128xbf16>
    %c0_12 = arith.constant 0 : index
    %c0_13 = arith.constant 0 : index
    %18 = vector.load %arg6[%c0_12, %c0_13] : memref<128x128xbf16, #tpu.memory_space<vmem>>, vector<128x128xbf16>
    %cst_14 = arith.constant dense<0.000000e+00> : vector<8x128xf32>
    %19 = tpu.matmul %17, %18, %cst_14 {dimension_numbers = #tpu.dot_dimension_numbers<[1], [0], [0], [1], [0, 0, 1, 1], [], []>} : vector<8x128xbf16>, vector<128x128xbf16>, vector<8x128xf32> -> vector<8x128xf32>
    %c0_15 = arith.constant 0 : index
    %c0_16 = arith.constant 0 : index
    %20 = vector.load %arg7[%c0_15, %c0_16] : memref<1x128xf32, #tpu.memory_space<vmem>>, vector<1x128xf32>
    %21 = vector.broadcast %20 : vector<1x128xf32> to vector<8x128xf32>
    %22 = arith.addf %19, %21 : vector<8x128xf32>
    %cst_17 = arith.constant 0.000000e+00 : f32
    %23 = vector.broadcast %cst_17 : f32 to vector<8x128xf32>
    %24 = arith.maximumf %22, %23 : vector<8x128xf32>
    %25 = arith.truncf %24 : vector<8x128xf32> to vector<8x128xbf16>
    %c0_18 = arith.constant 0 : index
    %c0_19 = arith.constant 0 : index
    %26 = vector.load %arg8[%c0_18, %c0_19] : memref<128x128xbf16, #tpu.memory_space<vmem>>, vector<128x128xbf16>
    %cst_20 = arith.constant dense<0.000000e+00> : vector<8x128xf32>
    %27 = tpu.matmul %25, %26, %cst_20 {dimension_numbers = #tpu.dot_dimension_numbers<[1], [0], [0], [1], [0, 0, 1, 1], [], []>} : vector<8x128xbf16>, vector<128x128xbf16>, vector<8x128xf32> -> vector<8x128xf32>
    %c0_21 = arith.constant 0 : index
    %c0_22 = arith.constant 0 : index
    %28 = vector.load %arg9[%c0_21, %c0_22] : memref<1x128xf32, #tpu.memory_space<vmem>>, vector<1x128xf32>
    %29 = vector.broadcast %28 : vector<1x128xf32> to vector<8x128xf32>
    %30 = arith.addf %27, %29 : vector<8x128xf32>
    %cst_23 = arith.constant 0.000000e+00 : f32
    %31 = vector.broadcast %cst_23 : f32 to vector<8x128xf32>
    %32 = arith.maximumf %30, %31 : vector<8x128xf32>
    %33 = arith.truncf %32 : vector<8x128xf32> to vector<8x128xbf16>
    %c0_24 = arith.constant 0 : index
    %c0_25 = arith.constant 0 : index
    %34 = vector.load %arg10[%c0_24, %c0_25] : memref<128x128xbf16, #tpu.memory_space<vmem>>, vector<128x128xbf16>
    %cst_26 = arith.constant dense<0.000000e+00> : vector<8x128xf32>
    %35 = tpu.matmul %33, %34, %cst_26 {dimension_numbers = #tpu.dot_dimension_numbers<[1], [0], [0], [1], [0, 0, 1, 1], [], []>} : vector<8x128xbf16>, vector<128x128xbf16>, vector<8x128xf32> -> vector<8x128xf32>
    %c0_27 = arith.constant 0 : index
    %c0_28 = arith.constant 0 : index
    %36 = vector.load %arg11[%c0_27, %c0_28] : memref<1x128xf32, #tpu.memory_space<vmem>>, vector<1x128xf32>
    %37 = vector.broadcast %36 : vector<1x128xf32> to vector<8x128xf32>
    %38 = arith.addf %35, %37 : vector<8x128xf32>
    %39 = arith.truncf %38 : vector<8x128xf32> to vector<8x128xbf16>
    %c0_29 = arith.constant 0 : index
    %c0_30 = arith.constant 0 : index
    %40 = vector.load %arg12[%c0_29, %c0_30] : memref<8x128xbf16, #tpu.memory_space<vmem>>, vector<8x128xbf16>
    tpu.vector_store %arg12[%c0_29, %c0_30], %39 {strides = array<i32>} : memref<8x128xbf16, #tpu.memory_space<vmem>>, vector<8x128xbf16>,
    return
  }
  func.func @transform_0(%arg0: i32) -> (i32, i32) {
    %c0_i32 = arith.constant 0 : i32
    %c0_i32_0 = arith.constant 0 : i32
    return %arg0, %c0_i32 : i32, i32
  }
  func.func @transform_1(%arg0: i32) -> (i32, i32) {
    %c0_i32 = arith.constant 0 : i32
    %c0_i32_0 = arith.constant 0 : i32
    %c0_i32_1 = arith.constant 0 : i32
    return %c0_i32, %c0_i32_0 : i32, i32
  }
  func.func @transform_2(%arg0: i32) -> (i32, i32) {
    %c0_i32 = arith.constant 0 : i32
    %c0_i32_0 = arith.constant 0 : i32
    %c0_i32_1 = arith.constant 0 : i32
    return %c0_i32, %c0_i32_0 : i32, i32
  }
  func.func @transform_3(%arg0: i32) -> (i32, i32) {
    %c0_i32 = arith.constant 0 : i32
    %c0_i32_0 = arith.constant 0 : i32
    %c0_i32_1 = arith.constant 0 : i32
    return %c0_i32, %c0_i32_0 : i32, i32
  }
  func.func @transform_4(%arg0: i32) -> (i32, i32) {
    %c0_i32 = arith.constant 0 : i32
    %c0_i32_0 = arith.constant 0 : i32
    %c0_i32_1 = arith.constant 0 : i32
    return %c0_i32, %c0_i32_0 : i32, i32
  }
  func.func @transform_5(%arg0: i32) -> (i32, i32) {
    %c0_i32 = arith.constant 0 : i32
    %c0_i32_0 = arith.constant 0 : i32
    %c0_i32_1 = arith.constant 0 : i32
    return %c0_i32, %c0_i32_0 : i32, i32
  }
  func.func @transform_6(%arg0: i32) -> (i32, i32) {
    %c0_i32 = arith.constant 0 : i32
    %c0_i32_0 = arith.constant 0 : i32
    %c0_i32_1 = arith.constant 0 : i32
    return %c0_i32, %c0_i32_0 : i32, i32
  }
  func.func @transform_7(%arg0: i32) -> (i32, i32) {
    %c0_i32 = arith.constant 0 : i32
    %c0_i32_0 = arith.constant 0 : i32
    %c0_i32_1 = arith.constant 0 : i32
    return %c0_i32, %c0_i32_0 : i32, i32
  }
  func.func @transform_8(%arg0: i32) -> (i32, i32) {
    %c0_i32 = arith.constant 0 : i32
    %c0_i32_0 = arith.constant 0 : i32
    %c0_i32_1 = arith.constant 0 : i32
    return %c0_i32, %c0_i32_0 : i32, i32
  }
  func.func @transform_9(%arg0: i32) -> (i32, i32) {
    %c0_i32 = arith.constant 0 : i32
    %c0_i32_0 = arith.constant 0 : i32
    %c0_i32_1 = arith.constant 0 : i32
    return %c0_i32, %c0_i32_0 : i32, i32
  }
  func.func @transform_10(%arg0: i32) -> (i32, i32) {
    %c0_i32 = arith.constant 0 : i32
    %c0_i32_0 = arith.constant 0 : i32
    %c0_i32_1 = arith.constant 0 : i32
    return %c0_i32, %c0_i32_0 : i32, i32
  }
  func.func @transform_11(%arg0: i32) -> (i32, i32) {
    %c0_i32 = arith.constant 0 : i32
    %c0_i32_0 = arith.constant 0 : i32
    return %arg0, %c0_i32 : i32, i32
  }
}

</mosaic_0001>

<llo_original>
// kernel: neural_net_forward.1
$region0: #{neural_net_forward.1}
  #allocation0 [shape = 'u32[]', space=smem, size = 0x4, offset = 0x4, fixed_abs, tag = 'smem constant byte address 0x4 - core index']
  #allocation1 [shape = 'u32[72,128]{1,0:T(1,128)}', space=vmem, size = 0x9000, scoped, tag = 'internal scratch']
  %s0 = inlined_call_operand.hbm [shape: f32[8,64], index: 0, kind: input, shape index: {}]
  %s1 = inlined_call_operand.hbm [shape: bf16[64,256], index: 1, kind: input, shape index: {}]
  %s2 = inlined_call_operand.hbm [shape: f32[1,256], index: 2, kind: input, shape index: {}]
  %s3 = inlined_call_operand.hbm [shape: bf16[256,128], index: 3, kind: input, shape index: {}]
  %s4 = inlined_call_operand.vmem [shape: f32[1,128], index: 4, kind: input, shape index: {}]
  %s5 = inlined_call_operand.hbm [shape: bf16[128,128], index: 5, kind: input, shape index: {}]
  %s6 = inlined_call_operand.vmem [shape: f32[1,128], index: 6, kind: input, shape index: {}]
  %s7 = inlined_call_operand.hbm [shape: bf16[128,128], index: 7, kind: input, shape index: {}]
  %s8 = inlined_call_operand.vmem [shape: f32[1,128], index: 8, kind: input, shape index: {}]
  %s9 = inlined_call_operand.hbm [shape: bf16[128,128], index: 9, kind: input, shape index: {}]
  %s10 = inlined_call_operand.vmem [shape: f32[1,128], index: 10, kind: input, shape index: {}]
  %s11 = inlined_call_operand.vmem [shape: bf16[8,128], index: 11, kind: output, shape index: {}]
  %s12 = sld [smem:[#allocation0]]
  $region82: #{neural_net_forward.1} parent=0
    _
  %s14 = ssub.s32 1, %s12
  %s15 = scalar_select 0, %s14, %s12
  $region1: #{neural_net_forward.1} parent=0
    #allocation2 [shape = 'u8[4096]{0}', space=vmem, size = 0x1000, scoped, tag = 'input window, operand 0, single buffered']
    #allocation3 [shape = 's32[1]{0}', space=sflag, size = 0x4, scoped, tag = 'scoped memory for neural_net_forward.1']
    #allocation4 [shape = 'u8[32768]{0}', space=vmem, size = 0x8000, scoped, tag = 'input window, operand 1, single buffered']
    #allocation5 [shape = 's32[1]{0}', space=sflag, size = 0x4, scoped, tag = 'scoped memory for neural_net_forward.1']
    #allocation6 [shape = 'u8[1024]{0}', space=vmem, size = 0x400, scoped, tag = 'input window, operand 2, single buffered']
    #allocation7 [shape = 'u8[65536]{0}', space=vmem, size = 0x10000, scoped, tag = 'input window, operand 3, single buffered']
    #allocation8 [shape = 's32[1]{0}', space=sflag, size = 0x4, scoped, tag = 'scoped memory for neural_net_forward.1']
    #allocation9 [shape = 'u8[32768]{0}', space=vmem, size = 0x8000, scoped, tag = 'input window, operand 5, single buffered']
    #allocation10 [shape = 'u8[32768]{0}', space=vmem, size = 0x8000, scoped, tag = 'input window, operand 7, single buffered']
    #allocation11 [shape = 's32[1]{0}', space=sflag, size = 0x4, scoped, tag = 'scoped memory for neural_net_forward.1']
    #allocation12 [shape = 'u8[32768]{0}', space=vmem, size = 0x8000, scoped, tag = 'input window, operand 9, single buffered']
    %16 = vsyncpa [#allocation3], 0
    %17 = vsyncpa [#allocation5], 0
    %18 = vsyncpa [#allocation8], 0
    %19 = vsyncpa [#allocation11], 0
    // Predicated region
    $region2: #{neural_net_forward.1} parent=1 // pred_check
      _
    $region3: #{neural_net_forward.1} parent=1 // pred_check_branch
      %21 = sbr.rel (0) target = $region5
    $region4: #{neural_net_forward.1} parent=1 // pred_region
      %23 = vsyncadd [#allocation3], 0
      %s25 = sshll.u32 %s0, 4
      %s26 = int_to_ptr.hbm [resolvable:$true] %s25
      %s27 = sshll.u32 [#allocation2], 4
      %s28 = int_to_ptr.vmem [resolvable:$true] %s27
      %30 = dma.hbm_to_vmem [thread:$0]  %s26, 128, %s28, [#allocation3]
    $region5: #{neural_net_forward.1} parent=1 // pred_fallthru
      _
    // Predicated region
    $region6: #{neural_net_forward.1} parent=1 // pred_check
      _
    $region7: #{neural_net_forward.1} parent=1 // pred_check_branch
      %32 = sbr.rel (0) target = $region9
    $region8: #{neural_net_forward.1} parent=1 // pred_region
      %34 = vsyncadd [#allocation5], 0
      %s35 = sshll.u32 %s1, 4
      %s36 = int_to_ptr.hbm [resolvable:$true] %s35
      %s37 = sshll.u32 [#allocation4], 4
      %s38 = int_to_ptr.vmem [resolvable:$true] %s37
      %43 = dma.hbm_to_vmem [thread:$0]  %s36, 1024, %s38, [#allocation5], 128, 128, 8
    $region9: #{neural_net_forward.1} parent=1 // pred_fallthru
      _
    // Predicated region
    $region10: #{neural_net_forward.1} parent=1 // pred_check
      _
    $region11: #{neural_net_forward.1} parent=1 // pred_check_branch
      %45 = sbr.rel (0) target = $region13
    $region12: #{neural_net_forward.1} parent=1 // pred_region
      %47 = vsyncadd [#allocation5], 0
      %s49 = sshll.u32 %s2, 4
      %s50 = int_to_ptr.hbm [resolvable:$true] %s49
      %s51 = sshll.u32 [#allocation6], 4
      %s52 = int_to_ptr.vmem [resolvable:$true] %s51
      %54 = dma.hbm_to_vmem [thread:$0]  %s50, 32, %s52, [#allocation5]
    $region13: #{neural_net_forward.1} parent=1 // pred_fallthru
      _
    // Predicated region
    $region14: #{neural_net_forward.1} parent=1 // pred_check
      _
    $region15: #{neural_net_forward.1} parent=1 // pred_check_branch
      %56 = sbr.rel (0) target = $region17
    $region16: #{neural_net_forward.1} parent=1 // pred_region
      %58 = vsyncadd [#allocation8], 0
      %s59 = sshll.u32 %s3, 4
      %s60 = int_to_ptr.hbm [resolvable:$true] %s59
      %s61 = sshll.u32 [#allocation7], 4
      %s62 = int_to_ptr.vmem [resolvable:$true] %s61
      %67 = dma.hbm_to_vmem [thread:$0]  %s60, 2048, %s62, [#allocation8], 64, 64, 4
    $region17: #{neural_net_forward.1} parent=1 // pred_fallthru
      _
    // Predicated region
    $region18: #{neural_net_forward.1} parent=1 // pred_check
      _
    $region19: #{neural_net_forward.1} parent=1 // pred_check_branch
      %69 = sbr.rel (0) target = $region21
    $region20: #{neural_net_forward.1} parent=1 // pred_region
      _
    $region21: #{neural_net_forward.1} parent=1 // pred_fallthru
      _
    // Predicated region
    $region22: #{neural_net_forward.1} parent=1 // pred_check
      _
    $region23: #{neural_net_forward.1} parent=1 // pred_check_branch
      %71 = sbr.rel (0) target = $region25
    $region24: #{neural_net_forward.1} parent=1 // pred_region
      %73 = vsyncadd [#allocation8], 0
      %s74 = sshll.u32 %s5, 4
      %s75 = int_to_ptr.hbm [resolvable:$true] %s74
      %s76 = sshll.u32 [#allocation9], 4
      %s77 = int_to_ptr.vmem [resolvable:$true] %s76
      %82 = dma.hbm_to_vmem [thread:$0]  %s75, 1024, %s77, [#allocation8], 64, 64, 4
    $region25: #{neural_net_forward.1} parent=1 // pred_fallthru
      _
    // Predicated region
    $region26: #{neural_net_forward.1} parent=1 // pred_check
      _
    $region27: #{neural_net_forward.1} parent=1 // pred_check_branch
      %84 = sbr.rel (0) target = $region29
    $region28: #{neural_net_forward.1} parent=1 // pred_region
      _
    $region29: #{neural_net_forward.1} parent=1 // pred_fallthru
      _
    // Predicated region
    $region30: #{neural_net_forward.1} parent=1 // pred_check
      _
    $region31: #{neural_net_forward.1} parent=1 // pred_check_branch
      %86 = sbr.rel (0) target = $region33
    $region32: #{neural_net_forward.1} parent=1 // pred_region
      %88 = vsyncadd [#allocation11], 0
      %s89 = sshll.u32 %s7, 4
      %s90 = int_to_ptr.hbm [resolvable:$true] %s89
      %s91 = sshll.u32 [#allocation10], 4
      %s92 = int_to_ptr.vmem [resolvable:$true] %s91
      %97 = dma.hbm_to_vmem [thread:$0]  %s90, 1024, %s92, [#allocation11], 64, 64, 4
    $region33: #{neural_net_forward.1} parent=1 // pred_fallthru
      _
    // Predicated region
    $region34: #{neural_net_forward.1} parent=1 // pred_check
      _
    $region35: #{neural_net_forward.1} parent=1 // pred_check_branch
      %99 = sbr.rel (0) target = $region37
    $region36: #{neural_net_forward.1} parent=1 // pred_region
      _
    $region37: #{neural_net_forward.1} parent=1 // pred_fallthru
      _
    // Predicated region
    $region38: #{neural_net_forward.1} parent=1 // pred_check
      _
    $region39: #{neural_net_forward.1} parent=1 // pred_check_branch
      %101 = sbr.rel (0) target = $region41
    $region40: #{neural_net_forward.1} parent=1 // pred_region
      %103 = vsyncadd [#allocation11], 0
      %s104 = sshll.u32 %s9, 4
      %s105 = int_to_ptr.hbm [resolvable:$true] %s104
      %s106 = sshll.u32 [#allocation12], 4
      %s107 = int_to_ptr.vmem [resolvable:$true] %s106
      %112 = dma.hbm_to_vmem [thread:$0]  %s105, 1024, %s107, [#allocation11], 64, 64, 4
    $region41: #{neural_net_forward.1} parent=1 // pred_fallthru
      _
    // Predicated region
    $region42: #{neural_net_forward.1} parent=1 // pred_check
      _
    $region43: #{neural_net_forward.1} parent=1 // pred_check_branch
      %114 = sbr.rel (0) target = $region45
    $region44: #{neural_net_forward.1} parent=1 // pred_region
      _
    $region45: #{neural_net_forward.1} parent=1 // pred_fallthru
      _
    // Predicated region
    $region46: #{neural_net_forward.1} parent=1 // pred_check
      _
    $region47: #{neural_net_forward.1} parent=1 // pred_check_branch
      %116 = sbr.rel (0) target = $region49
    $region48: #{neural_net_forward.1} parent=1 // pred_region
      %118 = dma.done [#allocation3], 128
    $region49: #{neural_net_forward.1} parent=1 // pred_fallthru
      _
    // Predicated region
    $region50: #{neural_net_forward.1} parent=1 // pred_check
      _
    $region51: #{neural_net_forward.1} parent=1 // pred_check_branch
      %120 = sbr.rel (0) target = $region53
    $region52: #{neural_net_forward.1} parent=1 // pred_region
      %122 = dma.done [#allocation5], 1024
    $region53: #{neural_net_forward.1} parent=1 // pred_fallthru
      _
    // Predicated region
    $region54: #{neural_net_forward.1} parent=1 // pred_check
      _
    $region55: #{neural_net_forward.1} parent=1 // pred_check_branch
      %124 = sbr.rel (0) target = $region57
    $region56: #{neural_net_forward.1} parent=1 // pred_region
      %126 = dma.done [#allocation5], 32
    $region57: #{neural_net_forward.1} parent=1 // pred_fallthru
      _
    // Predicated region
    $region58: #{neural_net_forward.1} parent=1 // pred_check
      _
    $region59: #{neural_net_forward.1} parent=1 // pred_check_branch
      %128 = sbr.rel (0) target = $region61
    $region60: #{neural_net_forward.1} parent=1 // pred_region
      %130 = dma.done [#allocation8], 2048
    $region61: #{neural_net_forward.1} parent=1 // pred_fallthru
      _
    // Predicated region
    $region62: #{neural_net_forward.1} parent=1 // pred_check
      _
    $region63: #{neural_net_forward.1} parent=1 // pred_check_branch
      %132 = sbr.rel (0) target = $region65
    $region64: #{neural_net_forward.1} parent=1 // pred_region
      %134 = dma.done [#allocation8], 1024
    $region65: #{neural_net_forward.1} parent=1 // pred_fallthru
      _
    // Predicated region
    $region66: #{neural_net_forward.1} parent=1 // pred_check
      _
    $region67: #{neural_net_forward.1} parent=1 // pred_check_branch
      %136 = sbr.rel (0) target = $region69
    $region68: #{neural_net_forward.1} parent=1 // pred_region
      %138 = dma.done [#allocation11], 1024
    $region69: #{neural_net_forward.1} parent=1 // pred_fallthru
      _
    // Predicated region
    $region70: #{neural_net_forward.1} parent=1 // pred_check
      _
    $region71: #{neural_net_forward.1} parent=1 // pred_check_branch
      %140 = sbr.rel (0) target = $region73
    $region72: #{neural_net_forward.1} parent=1 // pred_region
      %142 = dma.done [#allocation11], 1024
    $region73: #{neural_net_forward.1} parent=1 // pred_fallthru
      _
    %v144 = vld [vmem:[#allocation2] sm:$0xff]
    %v145 = vpack.c.bf16 %v144, %v144
    %v146 = vld [vmem:[#allocation4] sm:$0xff]
    %v147 = vld [vmem:[#allocation4 + $0x8] sm:$0xff]
    %v148 = vld [vmem:[#allocation4 + $0x10] sm:$0xff]
    %v149 = vld [vmem:[#allocation4 + $0x18] sm:$0xff]
    %v150 = vld [vmem:[#allocation4 + $0x20] sm:$0xff]
    %v151 = vld [vmem:[#allocation4 + $0x28] sm:$0xff]
    %v152 = vld [vmem:[#allocation4 + $0x30] sm:$0xff]
    %v153 = vld [vmem:[#allocation4 + $0x38] sm:$0xff]
    %v154 = vld [vmem:[#allocation6] sm:$0x3]
    %v156 = vperm.slane %v154, 0
    %v157 = vperm.slane %v154, 1
    %v168 = vunpack.c.l.b16 %v146
    %v169 = vunpack.c.h.b16 %v146
    %v170 = vunpack.c.l.b16 %v147
    %v171 = vunpack.c.h.b16 %v147
    %v172 = vunpack.c.l.b16 %v148
    %v173 = vunpack.c.h.b16 %v148
    %v174 = vunpack.c.l.b16 %v149
    %v175 = vunpack.c.h.b16 %v149
    %v176 = vunpack.c.l.b16 %v150
    %v177 = vunpack.c.h.b16 %v150
    %v178 = vunpack.c.l.b16 %v151
    %v179 = vunpack.c.h.b16 %v151
    %v180 = vunpack.c.l.b16 %v152
    %v181 = vunpack.c.h.b16 %v152
    %v182 = vunpack.c.l.b16 %v153
    %v183 = vunpack.c.h.b16 %v153
    %v184 = vpack.c.b16 %v170, %v168
    %v185 = vpack.c.b16 %v171, %v169
    %v186 = vpack.c.b16 %v174, %v172
    %v187 = vpack.c.b16 %v175, %v173
    %v188 = vpack.c.b16 %v178, %v176
    %v189 = vpack.c.b16 %v179, %v177
    %v190 = vpack.c.b16 %v182, %v180
    %v191 = vpack.c.b16 %v183, %v181
    %vm200 = vcmask 523264
    %v202 = vsel %vm200, %v145, 0
    %204 = vmatpush.bf16.msra.mxu0 0
    %205 = vmatpush.bf16.msra.mxu0 0
    %206 = vmatpush.bf16.msra.mxu0 0
    %207 = vmatpush.bf16.msra.mxu0 0
    %208 = vmatpush.bf16.msra.mxu0 %v190
    %209 = vmatpush.bf16.msra.mxu0 %v188
    %210 = vmatpush.bf16.msra.mxu0 %v186
    %211 = vmatpush.bf16.msra.mxu0 %v184
    %212 = vmatmul.bf16.gmra.mxu0 %v202
    %v213 = vpop.f32.mrf.mxu0
    %v214 = vadd.f32 %v156, %v213
    %v215 = vpop.f32.mrf.mxu0
    %216 = vdwg.mxu0
    %217 = vmatpush.bf16.msra.mxu0 0
    %218 = vmatpush.bf16.msra.mxu0 0
    %219 = vmatpush.bf16.msra.mxu0 0
    %220 = vmatpush.bf16.msra.mxu0 0
    %221 = vmatpush.bf16.msra.mxu0 %v191
    %222 = vmatpush.bf16.msra.mxu0 %v189
    %223 = vmatpush.bf16.msra.mxu0 %v187
    %224 = vmatpush.bf16.msra.mxu0 %v185
    %225 = vmatmul.bf16.gmra.mxu0 %v202
    %v226 = vpop.f32.mrf.mxu0
    %v227 = vadd.f32 %v157, %v226
    %v228 = vpop.f32.mrf.mxu0
    %229 = vdwg.mxu0
    %v230 = vmax.f32 %v214, 0.0
    %v231 = vmax.f32 %v227, 0.0
    %v232 = vpack.c.bf16 %v230, %v230
    %v233 = vpack.c.bf16 %v231, %v231
    %v234 = vld [vmem:[#allocation7] sm:$0xf]
    %v235 = vld [vmem:[#allocation7 + $0x4] sm:$0xf]
    %v236 = vld [vmem:[#allocation7 + $0x8] sm:$0xf]
    %v237 = vld [vmem:[#allocation7 + $0xc] sm:$0xf]
    %v238 = vld [vmem:[#allocation7 + $0x10] sm:$0xf]
    %v239 = vld [vmem:[#allocation7 + $0x14] sm:$0xf]
    %v240 = vld [vmem:[#allocation7 + $0x18] sm:$0xf]
    %v241 = vld [vmem:[#allocation7 + $0x1c] sm:$0xf]
    %v242 = vld [vmem:[#allocation7 + $0x20] sm:$0xf]
    %v243 = vld [vmem:[#allocation7 + $0x24] sm:$0xf]
    %v244 = vld [vmem:[#allocation7 + $0x28] sm:$0xf]
    %v245 = vld [vmem:[#allocation7 + $0x2c] sm:$0xf]
    %v246 = vld [vmem:[#allocation7 + $0x30] sm:$0xf]
    %v247 = vld [vmem:[#allocation7 + $0x34] sm:$0xf]
    %v248 = vld [vmem:[#allocation7 + $0x38] sm:$0xf]
    %v249 = vld [vmem:[#allocation7 + $0x3c] sm:$0xf]
    %v250 = vld [vmem:[#allocation7 + $0x40] sm:$0xf]
    %v251 = vld [vmem:[#allocation7 + $0x44] sm:$0xf]
    %v252 = vld [vmem:[#allocation7 + $0x48] sm:$0xf]
    %v253 = vld [vmem:[#allocation7 + $0x4c] sm:$0xf]
    %v254 = vld [vmem:[#allocation7 + $0x50] sm:$0xf]
    %v255 = vld [vmem:[#allocation7 + $0x54] sm:$0xf]
    %v256 = vld [vmem:[#allocation7 + $0x58] sm:$0xf]
    %v257 = vld [vmem:[#allocation7 + $0x5c] sm:$0xf]
    %v258 = vld [vmem:[#allocation7 + $0x60] sm:$0xf]
    %v259 = vld [vmem:[#allocation7 + $0x64] sm:$0xf]
    %v260 = vld [vmem:[#allocation7 + $0x68] sm:$0xf]
    %v261 = vld [vmem:[#allocation7 + $0x6c] sm:$0xf]
    %v262 = vld [vmem:[#allocation7 + $0x70] sm:$0xf]
    %v263 = vld [vmem:[#allocation7 + $0x74] sm:$0xf]
    %v264 = vld [vmem:[#allocation7 + $0x78] sm:$0xf]
    %v265 = vld [vmem:[#allocation7 + $0x7c] sm:$0xf]
    %v266 = vld [vmem:[%s4] sm:$0x1]
    %v268 = vperm.slane %v266, 0
    %v302 = vunpack.c.l.b16 %v234
    %v303 = vunpack.c.l.b16 %v235
    %v304 = vunpack.c.l.b16 %v236
    %v305 = vunpack.c.l.b16 %v237
    %v306 = vunpack.c.l.b16 %v238
    %v307 = vunpack.c.l.b16 %v239
    %v308 = vunpack.c.l.b16 %v240
    %v309 = vunpack.c.l.b16 %v241
    %v310 = vunpack.c.l.b16 %v242
    %v311 = vunpack.c.l.b16 %v243
    %v312 = vunpack.c.l.b16 %v244
    %v313 = vunpack.c.l.b16 %v245
    %v314 = vunpack.c.l.b16 %v246
    %v315 = vunpack.c.l.b16 %v247
    %v316 = vunpack.c.l.b16 %v248
    %v317 = vunpack.c.l.b16 %v249
    %v318 = vunpack.c.l.b16 %v250
    %v319 = vunpack.c.l.b16 %v251
    %v320 = vunpack.c.l.b16 %v252
    %v321 = vunpack.c.l.b16 %v253
    %v322 = vunpack.c.l.b16 %v254
    %v323 = vunpack.c.l.b16 %v255
    %v324 = vunpack.c.l.b16 %v256
    %v325 = vunpack.c.l.b16 %v257
    %v326 = vunpack.c.l.b16 %v258
    %v327 = vunpack.c.l.b16 %v259
    %v328 = vunpack.c.l.b16 %v260
    %v329 = vunpack.c.l.b16 %v261
    %v330 = vunpack.c.l.b16 %v262
    %v331 = vunpack.c.l.b16 %v263
    %v332 = vunpack.c.l.b16 %v264
    %v333 = vunpack.c.l.b16 %v265
    %v334 = vpack.c.b16 %v303, %v302
    %v335 = vpack.c.b16 %v305, %v304
    %v336 = vpack.c.b16 %v307, %v306
    %v337 = vpack.c.b16 %v309, %v308
    %v338 = vpack.c.b16 %v311, %v310
    %v339 = vpack.c.b16 %v313, %v312
    %v340 = vpack.c.b16 %v315, %v314
    %v341 = vpack.c.b16 %v317, %v316
    %v342 = vpack.c.b16 %v319, %v318
    %v343 = vpack.c.b16 %v321, %v320
    %v344 = vpack.c.b16 %v323, %v322
    %v345 = vpack.c.b16 %v325, %v324
    %v346 = vpack.c.b16 %v327, %v326
    %v347 = vpack.c.b16 %v329, %v328
    %v348 = vpack.c.b16 %v331, %v330
    %v349 = vpack.c.b16 %v333, %v332
    %366 = vmatpush.bf16.msra.mxu0 %v341
    %367 = vmatpush.bf16.msra.mxu0 %v340
    %368 = vmatpush.bf16.msra.mxu0 %v339
    %369 = vmatpush.bf16.msra.mxu0 %v338
    %370 = vmatpush.bf16.msra.mxu0 %v337
    %371 = vmatpush.bf16.msra.mxu0 %v336
    %372 = vmatpush.bf16.msra.mxu0 %v335
    %373 = vmatpush.bf16.msra.mxu0 %v334
    %374 = vmatmul.bf16.gmra.mxu0 %v232
    %v375 = vpop.f32.mrf.mxu0
    %v376 = vadd.f32 %v268, %v375
    %v377 = vpop.f32.mrf.mxu0
    %378 = vdwg.mxu0
    %379 = vmatpush.bf16.msra.mxu0 %v349
    %380 = vmatpush.bf16.msra.mxu0 %v348
    %381 = vmatpush.bf16.msra.mxu0 %v347
    %382 = vmatpush.bf16.msra.mxu0 %v346
    %383 = vmatpush.bf16.msra.mxu0 %v345
    %384 = vmatpush.bf16.msra.mxu0 %v344
    %385 = vmatpush.bf16.msra.mxu0 %v343
    %386 = vmatpush.bf16.msra.mxu0 %v342
    %387 = vmatmul.bf16.gmra.mxu0 %v233
    %v388 = vpop.f32.mrf.mxu0
    %v389 = vadd.f32 %v376, %v388
    %v390 = vpop.f32.mrf.mxu0
    %391 = vdwg.mxu0
    %v392 = vmax.f32 %v389, 0.0
    %v393 = vpack.c.bf16 %v392, %v392
    %v394 = vld [vmem:[#allocation9] sm:$0xf]
    %v395 = vld [vmem:[#allocation9 + $0x4] sm:$0xf]
    %v396 = vld [vmem:[#allocation9 + $0x8] sm:$0xf]
    %v397 = vld [vmem:[#allocation9 + $0xc] sm:$0xf]
    %v398 = vld [vmem:[#allocation9 + $0x10] sm:$0xf]
    %v399 = vld [vmem:[#allocation9 + $0x14] sm:$0xf]
    %v400 = vld [vmem:[#allocation9 + $0x18] sm:$0xf]
    %v401 = vld [vmem:[#allocation9 + $0x1c] sm:$0xf]
    %v402 = vld [vmem:[#allocation9 + $0x20] sm:$0xf]
    %v403 = vld [vmem:[#allocation9 + $0x24] sm:$0xf]
    %v404 = vld [vmem:[#allocation9 + $0x28] sm:$0xf]
    %v405 = vld [vmem:[#allocation9 + $0x2c] sm:$0xf]
    %v406 = vld [vmem:[#allocation9 + $0x30] sm:$0xf]
    %v407 = vld [vmem:[#allocation9 + $0x34] sm:$0xf]
    %v408 = vld [vmem:[#allocation9 + $0x38] sm:$0xf]
    %v409 = vld [vmem:[#allocation9 + $0x3c] sm:$0xf]
    %v410 = vld [vmem:[%s6] sm:$0x1]
    %v412 = vperm.slane %v410, 0
    %v430 = vunpack.c.l.b16 %v394
    %v431 = vunpack.c.l.b16 %v395
    %v432 = vunpack.c.l.b16 %v396
    %v433 = vunpack.c.l.b16 %v397
    %v434 = vunpack.c.l.b16 %v398
    %v435 = vunpack.c.l.b16 %v399
    %v436 = vunpack.c.l.b16 %v400
    %v437 = vunpack.c.l.b16 %v401
    %v438 = vunpack.c.l.b16 %v402
    %v439 = vunpack.c.l.b16 %v403
    %v440 = vunpack.c.l.b16 %v404
    %v441 = vunpack.c.l.b16 %v405
    %v442 = vunpack.c.l.b16 %v406
    %v443 = vunpack.c.l.b16 %v407
    %v444 = vunpack.c.l.b16 %v408
    %v445 = vunpack.c.l.b16 %v409
    %v446 = vpack.c.b16 %v431, %v430
    %v447 = vpack.c.b16 %v433, %v432
    %v448 = vpack.c.b16 %v435, %v434
    %v449 = vpack.c.b16 %v437, %v436
    %v450 = vpack.c.b16 %v439, %v438
    %v451 = vpack.c.b16 %v441, %v440
    %v452 = vpack.c.b16 %v443, %v442
    %v453 = vpack.c.b16 %v445, %v444
    %462 = vmatpush.bf16.msra.mxu0 %v453
    %463 = vmatpush.bf16.msra.mxu0 %v452
    %464 = vmatpush.bf16.msra.mxu0 %v451
    %465 = vmatpush.bf16.msra.mxu0 %v450
    %466 = vmatpush.bf16.msra.mxu0 %v449
    %467 = vmatpush.bf16.msra.mxu0 %v448
    %468 = vmatpush.bf16.msra.mxu0 %v447
    %469 = vmatpush.bf16.msra.mxu0 %v446
    %470 = vmatmul.bf16.gmra.mxu0 %v393
    %v471 = vpop.f32.mrf.mxu0
    %v472 = vadd.f32 %v412, %v471
    %v473 = vpop.f32.mrf.mxu0
    %474 = vdwg.mxu0
    %v475 = vmax.f32 %v472, 0.0
    %v476 = vpack.c.bf16 %v475, %v475
    %v477 = vld [vmem:[#allocation10] sm:$0xf]
    %v478 = vld [vmem:[#allocation10 + $0x4] sm:$0xf]
    %v479 = vld [vmem:[#allocation10 + $0x8] sm:$0xf]
    %v480 = vld [vmem:[#allocation10 + $0xc] sm:$0xf]
    %v481 = vld [vmem:[#allocation10 + $0x10] sm:$0xf]
    %v482 = vld [vmem:[#allocation10 + $0x14] sm:$0xf]
    %v483 = vld [vmem:[#allocation10 + $0x18] sm:$0xf]
    %v484 = vld [vmem:[#allocation10 + $0x1c] sm:$0xf]
    %v485 = vld [vmem:[#allocation10 + $0x20] sm:$0xf]
    %v486 = vld [vmem:[#allocation10 + $0x24] sm:$0xf]
    %v487 = vld [vmem:[#allocation10 + $0x28] sm:$0xf]
    %v488 = vld [vmem:[#allocation10 + $0x2c] sm:$0xf]
    %v489 = vld [vmem:[#allocation10 + $0x30] sm:$0xf]
    %v490 = vld [vmem:[#allocation10 + $0x34] sm:$0xf]
    %v491 = vld [vmem:[#allocation10 + $0x38] sm:$0xf]
    %v492 = vld [vmem:[#allocation10 + $0x3c] sm:$0xf]
    %v493 = vld [vmem:[%s8] sm:$0x1]
    %v495 = vperm.slane %v493, 0
    %v513 = vunpack.c.l.b16 %v477
    %v514 = vunpack.c.l.b16 %v478
    %v515 = vunpack.c.l.b16 %v479
    %v516 = vunpack.c.l.b16 %v480
    %v517 = vunpack.c.l.b16 %v481
    %v518 = vunpack.c.l.b16 %v482
    %v519 = vunpack.c.l.b16 %v483
    %v520 = vunpack.c.l.b16 %v484
    %v521 = vunpack.c.l.b16 %v485
    %v522 = vunpack.c.l.b16 %v486
    %v523 = vunpack.c.l.b16 %v487
    %v524 = vunpack.c.l.b16 %v488
    %v525 = vunpack.c.l.b16 %v489
    %v526 = vunpack.c.l.b16 %v490
    %v527 = vunpack.c.l.b16 %v491
    %v528 = vunpack.c.l.b16 %v492
    %v529 = vpack.c.b16 %v514, %v513
    %v530 = vpack.c.b16 %v516, %v515
    %v531 = vpack.c.b16 %v518, %v517
    %v532 = vpack.c.b16 %v520, %v519
    %v533 = vpack.c.b16 %v522, %v521
    %v534 = vpack.c.b16 %v524, %v523
    %v535 = vpack.c.b16 %v526, %v525
    %v536 = vpack.c.b16 %v528, %v527
    %545 = vmatpush.bf16.msra.mxu0 %v536
    %546 = vmatpush.bf16.msra.mxu0 %v535
    %547 = vmatpush.bf16.msra.mxu0 %v534
    %548 = vmatpush.bf16.msra.mxu0 %v533
    %549 = vmatpush.bf16.msra.mxu0 %v532
    %550 = vmatpush.bf16.msra.mxu0 %v531
    %551 = vmatpush.bf16.msra.mxu0 %v530
    %552 = vmatpush.bf16.msra.mxu0 %v529
    %553 = vmatmul.bf16.gmra.mxu0 %v476
    %v554 = vpop.f32.mrf.mxu0
    %v555 = vadd.f32 %v495, %v554
    %v556 = vpop.f32.mrf.mxu0
    %557 = vdwg.mxu0
    %v558 = vmax.f32 %v555, 0.0
    %v559 = vpack.c.bf16 %v558, %v558
    %v560 = vld [vmem:[#allocation12] sm:$0xf]
    %v561 = vld [vmem:[#allocation12 + $0x4] sm:$0xf]
    %v562 = vld [vmem:[#allocation12 + $0x8] sm:$0xf]
    %v563 = vld [vmem:[#allocation12 + $0xc] sm:$0xf]
    %v564 = vld [vmem:[#allocation12 + $0x10] sm:$0xf]
    %v565 = vld [vmem:[#allocation12 + $0x14] sm:$0xf]
    %v566 = vld [vmem:[#allocation12 + $0x18] sm:$0xf]
    %v567 = vld [vmem:[#allocation12 + $0x1c] sm:$0xf]
    %v568 = vld [vmem:[#allocation12 + $0x20] sm:$0xf]
    %v569 = vld [vmem:[#allocation12 + $0x24] sm:$0xf]
    %v570 = vld [vmem:[#allocation12 + $0x28] sm:$0xf]
    %v571 = vld [vmem:[#allocation12 + $0x2c] sm:$0xf]
    %v572 = vld [vmem:[#allocation12 + $0x30] sm:$0xf]
    %v573 = vld [vmem:[#allocation12 + $0x34] sm:$0xf]
    %v574 = vld [vmem:[#allocation12 + $0x38] sm:$0xf]
    %v575 = vld [vmem:[#allocation12 + $0x3c] sm:$0xf]
    %v576 = vld [vmem:[%s10] sm:$0x1]
    %v578 = vperm.slane %v576, 0
    %v596 = vunpack.c.l.b16 %v560
    %v597 = vunpack.c.l.b16 %v561
    %v598 = vunpack.c.l.b16 %v562
    %v599 = vunpack.c.l.b16 %v563
    %v600 = vunpack.c.l.b16 %v564
    %v601 = vunpack.c.l.b16 %v565
    %v602 = vunpack.c.l.b16 %v566
    %v603 = vunpack.c.l.b16 %v567
    %v604 = vunpack.c.l.b16 %v568
    %v605 = vunpack.c.l.b16 %v569
    %v606 = vunpack.c.l.b16 %v570
    %v607 = vunpack.c.l.b16 %v571
    %v608 = vunpack.c.l.b16 %v572
    %v609 = vunpack.c.l.b16 %v573
    %v610 = vunpack.c.l.b16 %v574
    %v611 = vunpack.c.l.b16 %v575
    %v612 = vpack.c.b16 %v597, %v596
    %v613 = vpack.c.b16 %v599, %v598
    %v614 = vpack.c.b16 %v601, %v600
    %v615 = vpack.c.b16 %v603, %v602
    %v616 = vpack.c.b16 %v605, %v604
    %v617 = vpack.c.b16 %v607, %v606
    %v618 = vpack.c.b16 %v609, %v608
    %v619 = vpack.c.b16 %v611, %v610
    %628 = vmatpush.bf16.msra.mxu0 %v619
    %629 = vmatpush.bf16.msra.mxu0 %v618
    %630 = vmatpush.bf16.msra.mxu0 %v617
    %631 = vmatpush.bf16.msra.mxu0 %v616
    %632 = vmatpush.bf16.msra.mxu0 %v615
    %633 = vmatpush.bf16.msra.mxu0 %v614
    %634 = vmatpush.bf16.msra.mxu0 %v613
    %635 = vmatpush.bf16.msra.mxu0 %v612
    %636 = vmatmul.bf16.gmra.mxu0 %v559
    %v637 = vpop.f32.mrf.mxu0
    %v638 = vadd.f32 %v578, %v637
    %v639 = vpop.f32.mrf.mxu0
    %640 = vdwg.mxu0
    %v641 = vpack.c.bf16 %v638, %v638
    %642 = vst [vmem:[%s11] sm:$0xf] %v641
    // Predicated region
    $region74: #{neural_net_forward.1} parent=1 // pred_check
      _
    $region75: #{neural_net_forward.1} parent=1 // pred_check_branch
      %644 = sbr.rel (0) target = $region77
    $region76: #{neural_net_forward.1} parent=1 // pred_region
      _
    $region77: #{neural_net_forward.1} parent=1 // pred_fallthru
      _
    // Predicated region
    $region78: #{neural_net_forward.1} parent=1 // pred_check
      _
    $region79: #{neural_net_forward.1} parent=1 // pred_check_branch
      %646 = sbr.rel (0) target = $region81
    $region80: #{neural_net_forward.1} parent=1 // pred_region
      _
    $region81: #{neural_net_forward.1} parent=1 // pred_fallthru
      _
    %647 = vsyncpa [#allocation3], 1
    %648 = vsyncpa [#allocation5], 1
    %649 = vsyncpa [#allocation8], 1
    %650 = vsyncpa [#allocation11], 1

</llo_original>
